<compile_context>
chip_gen: v7x
topology: tpu7x:2x2x1
jax: 0.10.0
libtpu: 0.0.40
codegen_flags: <defaults>
</compile_context>

<pallas_src>
import functools

import jax
import jax.numpy as jnp
from jax import lax
from jax.experimental import pallas as pl
from jax.experimental.pallas import tpu as pltpu


# --------------------------------------------------------------------------
# Kernel
# --------------------------------------------------------------------------
def dueling_dqn_kernel(x_ref, w1_ref, b1_ref, w2_ref, b2_ref, o_ref, *,
                       action_num):
    # ----- Fused layer 1: both branches in one bf16 MXU pass (f32 accum) ----
    x = x_ref[...].astype(jnp.bfloat16)                                 # (TB, S)
    h = jnp.dot(x, w1_ref[...], preferred_element_type=jnp.float32)     # (TB, 2H)
    h = jnp.maximum(h + b1_ref[...], 0.0)                               # f32 ReLU (VPU)

    # ----- Fused layer 2: block-diagonal packed weight, 128-lane wide -------
    # Column layout of y: [0, A) = advantage, A = value, rest = exact zeros
    # (pad cols of W2 and b2 are zero).
    y = jnp.dot(h.astype(jnp.bfloat16), w2_ref[...],
                preferred_element_type=jnp.float32) + b2_ref[...]       # (TB, 128)

    # ----- Dueling combine -------------------------------------------------
    # total = sum_a(advantage) + value  (pad lanes are exactly zero)
    total = jnp.sum(y, axis=1, keepdims=True)                           # (TB, 1)
    col = lax.broadcasted_iota(jnp.int32, y.shape, dimension=1)
    v = jnp.sum(jnp.where(col == action_num, y, 0.0),
                axis=1, keepdims=True)                                  # (TB, 1)
    a_mean = (total - v) * (1.0 / action_num)                           # (TB, 1)

    # Q = A + V - mean_a A ; store only the A real advantage columns.
    q = y + v - a_mean
    o_ref[...] = q[:, :action_num]                                      # (TB, A)


# --------------------------------------------------------------------------
# Wrapper
# --------------------------------------------------------------------------
_TILE_CANDIDATES = (1024, 512, 256, 128, 64, 32, 16, 8)


def _choose_tile_b(B: int) -> int:
    """Largest dividing tile <= 1024; ensure >=2 grid steps when possible so
    the parallel batch axis shards across v7x's two TensorCores."""
    best = None
    for t in _TILE_CANDIDATES:
        if B % t == 0:
            best = t
            break
    if best is None:
        return B  # odd / tiny batch: single full block
    if B // best == 1:
        # Single grid step: try to split into >=2 steps (helps v7x, free elsewhere).
        for t in _TILE_CANDIDATES:
            if t <= B // 2 and B % t == 0:
                return t
    return best


def dueling_dqn_forward(x, packed):
    """x: (B, STATE_NUM) float32. packed: output of pack_params(). Returns (B, A) f32."""
    B, S = x.shape
    A = packed["action_num"]
    w1, b1, w2, b2 = packed["w1"], packed["b1"], packed["w2"], packed["b2"]
    H2 = w1.shape[1]          # 2 * hidden
    n_pad = w2.shape[1]       # lane-padded intermediate width (>= A + 1)

    tile_b = _choose_tile_b(B)
    grid = (B // tile_b,)

    kernel = functools.partial(dueling_dqn_kernel, action_num=A)

    flops = 2 * B * (S * H2 + H2 * n_pad)
    bytes_accessed = (x.size * x.dtype.itemsize
                      + w1.size * w1.dtype.itemsize
                      + b1.size * b1.dtype.itemsize
                      + w2.size * w2.dtype.itemsize
                      + b2.size * b2.dtype.itemsize
                      + B * A * 4)

    out = pl.pallas_call(
        kernel,
        out_shape=jax.ShapeDtypeStruct((B, A), jnp.float32),
        grid=grid,
        in_specs=[
            pl.BlockSpec((tile_b, S), lambda i: (i, 0)),   # x: tiled over batch
            pl.BlockSpec((S, H2), lambda i: (0, 0)),       # W1 (pinned, VMEM-resident)
            pl.BlockSpec((1, H2), lambda i: (0, 0)),       # b1
            pl.BlockSpec((H2, n_pad), lambda i: (0, 0)),   # W2 (block-diag packed)
            pl.BlockSpec((1, n_pad), lambda i: (0, 0)),    # b2
        ],
        # Narrow output: last block dim == full array dim (A), so the (8,128)
        # rule is satisfied; cuts output HBM writeback vs. padded 128 lanes.
        out_specs=pl.BlockSpec((tile_b, A), lambda i: (i, 0)),
        compiler_params=pltpu.CompilerParams(
            dimension_semantics=("parallel",)),
        cost_estimate=pl.CostEstimate(
            flops=flops, transcendentals=0, bytes_accessed=bytes_accessed),
    )(x, w1, b1, w2, b2)

    return out


# --------------------------------------------------------------------------
# Parameter construction / packing
# --------------------------------------------------------------------------
def init_params(key, state_num, action_num, hidden=512):
    """Deterministic synthetic parameters (weights stored as (in, out))."""
    ks = jax.random.split(key, 8)
    scale1 = 1.0 / jnp.sqrt(state_num)
    scale2 = 1.0 / jnp.sqrt(hidden)
    return {
        "w1_a": jax.random.uniform(ks[0], (state_num, hidden), jnp.float32, -scale1, scale1),
        "b1_a": jax.random.uniform(ks[1], (1, hidden), jnp.float32, -scale1, scale1),
        "w1_v": jax.random.uniform(ks[2], (state_num, hidden), jnp.float32, -scale1, scale1),
        "b1_v": jax.random.uniform(ks[3], (1, hidden), jnp.float32, -scale1, scale1),
        "w2_a": jax.random.uniform(ks[4], (hidden, action_num), jnp.float32, -scale2, scale2),
        "b2_a": jax.random.uniform(ks[5], (1, action_num), jnp.float32, -scale2, scale2),
        "w2_v": jax.random.uniform(ks[6], (hidden, 1), jnp.float32, -scale2, scale2),
        "b2_v": jax.random.uniform(ks[7], (1, 1), jnp.float32, -scale2, scale2),
    }


def pack_params(p, action_num, hidden=512):
    """Pre-pack weights for the fused kernel (done once, outside the hot path)."""
    # Layer 1: concatenate advantage | value along the output dim.
    w1 = jnp.concatenate([p["w1_a"], p["w1_v"]], axis=1)             # (S, 2H)
    b1 = jnp.concatenate([p["b1_a"], p["b1_v"]], axis=1)             # (1, 2H)

    # Layer 2: block-diagonal (2H, n_pad); advantage in cols [0, A), value in
    # col A, remaining lanes exactly zero (the kernel's combine relies on this).
    n_pad = ((action_num + 1 + 127) // 128) * 128
    w2 = jnp.zeros((2 * hidden, n_pad), jnp.float32)
    w2 = w2.at[:hidden, :action_num].set(p["w2_a"])
    w2 = w2.at[hidden:, action_num:action_num + 1].set(p["w2_v"])
    b2 = jnp.zeros((1, n_pad), jnp.float32)
    b2 = b2.at[:, :action_num].set(p["b2_a"])
    b2 = b2.at[:, action_num:action_num + 1].set(p["b2_v"])

    return {
        "w1": w1.astype(jnp.bfloat16),   # bf16 matmul operands (halves weight DMA)
        "w2": w2.astype(jnp.bfloat16),
        "b1": b1,                        # biases stay f32 (VPU work in f32)
        "b2": b2,
        "action_num": action_num,
    }


# --------------------------------------------------------------------------
# Pure-JAX references
# --------------------------------------------------------------------------
def reference_forward(x, p):
    """f32 reference mirroring the PyTorch module exactly."""
    a = jax.nn.relu(x @ p["w1_a"] + p["b1_a"])
    v = jax.nn.relu(x @ p["w1_v"] + p["b1_v"])
    a = a @ p["w2_a"] + p["b2_a"]
    v = v @ p["w2_v"] + p["b2_v"]                    # (B, 1) -> broadcasts
    return a + v - jnp.mean(a, axis=1, keepdims=True)


def reference_forward_bf16(x, p):
    """Reference using the same bf16-operand / f32-accumulate numerics as the kernel."""
    def lin(inp, w, b):
        return jnp.dot(inp.astype(jnp.bfloat16), w.astype(jnp.bfloat16),
                       preferred_element_type=jnp.float32) + b
    a = jnp.maximum(lin(x, p["w1_a"], p["b1_a"]), 0.0)
    v = jnp.maximum(lin(x, p["w1_v"], p["b1_v"]), 0.0)
    a = lin(a, p["w2_a"], p["b2_a"])
    v = lin(v, p["w2_v"], p["b2_v"])
    return a + v - jnp.mean(a, axis=1, keepdims=True)


# --------------------------------------------------------------------------
if __name__ == "__main__":
    STATE_NUM = 32
    ACTION_NUM = 8
    BATCH = 8

    key = jax.random.PRNGKey(0)
    k_params, k_x = jax.random.split(key)
    params = init_params(k_params, STATE_NUM, ACTION_NUM)
    packed = pack_params(params, ACTION_NUM)
    x = jax.random.normal(k_x, (BATCH, STATE_NUM), dtype=jnp.float32)

    out = dueling_dqn_forward(x, packed)
    out = jax.block_until_ready(out)

    assert out.shape == (BATCH, ACTION_NUM)

    # Tight check vs. a reference with identical bf16-operand numerics.
    ref_bf16 = reference_forward_bf16(x, params)
    assert jnp.allclose(out, ref_bf16, atol=5e-3, rtol=5e-3), "mismatch vs bf16 reference"

    # Loose check vs. the exact f32 PyTorch-equivalent reference.
    ref_f32 = reference_forward(x, params)
    assert jnp.allclose(out, ref_f32, atol=5e-2, rtol=5e-2), "mismatch vs f32 reference"

    print("KERNEL_OK")
</pallas_src>

<mosaic_0001>
module attributes {stable_mosaic.version = 11 : i64} {
  func.func @dueling_dqn_kernel(%arg0: i32, %arg1: memref<8x32xf32, #tpu.memory_space<vmem>>, %arg2: memref<32x1024xbf16, #tpu.memory_space<vmem>>, %arg3: memref<1x1024xf32, #tpu.memory_space<vmem>>, %arg4: memref<1024x128xbf16, #tpu.memory_space<vmem>>, %arg5: memref<1x128xf32, #tpu.memory_space<vmem>>, %arg6: memref<8x8xf32, #tpu.memory_space<vmem>>) attributes {dimension_semantics = [#tpu.dimension_semantics<parallel>], iteration_bounds = array<i64: 1>, scalar_prefetch = 0 : i64, scratch_operands = 0 : i64, tpu.core_type = #tpu.core_type<tc>, window_params = [{transform_indices = @transform_0, window_bounds = array<i64: 8, 32>}, {pipeline_mode = #tpu.pipeline_mode<synchronous>, transform_indices = @transform_1, window_bounds = array<i64: 32, 1024>}, {pipeline_mode = #tpu.pipeline_mode<synchronous>, transform_indices = @transform_2, window_bounds = array<i64: 1, 1024>}, {pipeline_mode = #tpu.pipeline_mode<synchronous>, transform_indices = @transform_3, window_bounds = array<i64: 1024, 128>}, {pipeline_mode = #tpu.pipeline_mode<synchronous>, transform_indices = @transform_4, window_bounds = array<i64: 1, 128>}, {transform_indices = @transform_5, window_bounds = array<i64: 8, 8>}]} {
    %c0 = arith.constant 0 : index
    %c0_0 = arith.constant 0 : index
    %0 = vector.load %arg1[%c0, %c0_0] : memref<8x32xf32, #tpu.memory_space<vmem>>, vector<8x32xf32>
    %1 = arith.truncf %0 : vector<8x32xf32> to vector<8x32xbf16>
    %c0_1 = arith.constant 0 : index
    %c0_2 = arith.constant 0 : index
    %2 = vector.load %arg2[%c0_1, %c0_2] : memref<32x1024xbf16, #tpu.memory_space<vmem>>, vector<32x1024xbf16>
    %cst = arith.constant dense<0.000000e+00> : vector<8x1024xf32>
    %3 = tpu.matmul %1, %2, %cst {dimension_numbers = #tpu.dot_dimension_numbers<[1], [0], [0], [1], [0, 0, 1, 1], [], []>} : vector<8x32xbf16>, vector<32x1024xbf16>, vector<8x1024xf32> -> vector<8x1024xf32>
    %c0_3 = arith.constant 0 : index
    %c0_4 = arith.constant 0 : index
    %4 = vector.load %arg3[%c0_3, %c0_4] : memref<1x1024xf32, #tpu.memory_space<vmem>>, vector<1x1024xf32>
    %5 = vector.broadcast %4 : vector<1x1024xf32> to vector<8x1024xf32>
    %6 = arith.addf %3, %5 : vector<8x1024xf32>
    %cst_5 = arith.constant 0.000000e+00 : f32
    %7 = vector.broadcast %cst_5 : f32 to vector<8x1024xf32>
    %8 = arith.maximumf %6, %7 : vector<8x1024xf32>
    %9 = arith.truncf %8 : vector<8x1024xf32> to vector<8x1024xbf16>
    %c0_6 = arith.constant 0 : index
    %c0_7 = arith.constant 0 : index
    %10 = vector.load %arg4[%c0_6, %c0_7] : memref<1024x128xbf16, #tpu.memory_space<vmem>>, vector<1024x128xbf16>
    %cst_8 = arith.constant dense<0.000000e+00> : vector<8x128xf32>
    %11 = tpu.matmul %9, %10, %cst_8 {dimension_numbers = #tpu.dot_dimension_numbers<[1], [0], [0], [1], [0, 0, 1, 1], [], []>} : vector<8x1024xbf16>, vector<1024x128xbf16>, vector<8x128xf32> -> vector<8x128xf32>
    %c0_9 = arith.constant 0 : index
    %c0_10 = arith.constant 0 : index
    %12 = vector.load %arg5[%c0_9, %c0_10] : memref<1x128xf32, #tpu.memory_space<vmem>>, vector<1x128xf32>
    %13 = vector.broadcast %12 : vector<1x128xf32> to vector<8x128xf32>
    %14 = arith.addf %11, %13 : vector<8x128xf32>
    %cst_11 = arith.constant dense<0.000000e+00> : vector<8xf32>
    %15 = vector.multi_reduction <add>, %14, %cst_11 [1] : vector<8x128xf32> to vector<8xf32>
    %16 = vector.shape_cast %15 : vector<8xf32> to vector<8x1xf32>
    %17 = tpu.iota {dimensions = array<i32: 1>} : vector<8x128xi32>
    %c8_i32 = arith.constant 8 : i32
    %18 = vector.broadcast %c8_i32 : i32 to vector<8x128xi32>
    %19 = arith.cmpi eq, %17, %18 : vector<8x128xi32>
    %cst_12 = arith.constant 0.000000e+00 : f32
    %20 = vector.broadcast %cst_12 : f32 to vector<8x128xf32>
    %21 = arith.select %19, %14, %20 : vector<8x128xi1>, vector<8x128xf32>
    %cst_13 = arith.constant dense<0.000000e+00> : vector<8xf32>
    %22 = vector.multi_reduction <add>, %21, %cst_13 [1] : vector<8x128xf32> to vector<8xf32>
    %23 = vector.shape_cast %22 : vector<8xf32> to vector<8x1xf32>
    %24 = arith.subf %16, %23 : vector<8x1xf32>
    %cst_14 = arith.constant 1.250000e-01 : f32
    %25 = vector.broadcast %cst_14 : f32 to vector<8x1xf32>
    %26 = arith.mulf %24, %25 : vector<8x1xf32>
    %27 = vector.broadcast %23 : vector<8x1xf32> to vector<8x128xf32>
    %28 = arith.addf %14, %27 : vector<8x128xf32>
    %29 = vector.broadcast %26 : vector<8x1xf32> to vector<8x128xf32>
    %30 = arith.subf %28, %29 : vector<8x128xf32>
    %31 = vector.extract_strided_slice %30 {offsets = [0, 0], sizes = [8, 8], strides = [1, 1]} : vector<8x128xf32> to vector<8x8xf32>
    %c0_15 = arith.constant 0 : index
    %c0_16 = arith.constant 0 : index
    %32 = vector.load %arg6[%c0_15, %c0_16] : memref<8x8xf32, #tpu.memory_space<vmem>>, vector<8x8xf32>
    tpu.vector_store %arg6[%c0_15, %c0_16], %31 {strides = array<i32>} : memref<8x8xf32, #tpu.memory_space<vmem>>, vector<8x8xf32>,
    return
  }
  func.func @transform_0(%arg0: i32) -> (i32, i32) {
    %c0_i32 = arith.constant 0 : i32
    %c0_i32_0 = arith.constant 0 : i32
    return %arg0, %c0_i32 : i32, i32
  }
  func.func @transform_1(%arg0: i32) -> (i32, i32) {
    %c0_i32 = arith.constant 0 : i32
    %c0_i32_0 = arith.constant 0 : i32
    %c0_i32_1 = arith.constant 0 : i32
    return %c0_i32, %c0_i32_0 : i32, i32
  }
  func.func @transform_2(%arg0: i32) -> (i32, i32) {
    %c0_i32 = arith.constant 0 : i32
    %c0_i32_0 = arith.constant 0 : i32
    %c0_i32_1 = arith.constant 0 : i32
    return %c0_i32, %c0_i32_0 : i32, i32
  }
  func.func @transform_3(%arg0: i32) -> (i32, i32) {
    %c0_i32 = arith.constant 0 : i32
    %c0_i32_0 = arith.constant 0 : i32
    %c0_i32_1 = arith.constant 0 : i32
    return %c0_i32, %c0_i32_0 : i32, i32
  }
  func.func @transform_4(%arg0: i32) -> (i32, i32) {
    %c0_i32 = arith.constant 0 : i32
    %c0_i32_0 = arith.constant 0 : i32
    %c0_i32_1 = arith.constant 0 : i32
    return %c0_i32, %c0_i32_0 : i32, i32
  }
  func.func @transform_5(%arg0: i32) -> (i32, i32) {
    %c0_i32 = arith.constant 0 : i32
    %c0_i32_0 = arith.constant 0 : i32
    return %arg0, %c0_i32 : i32, i32
  }
}

</mosaic_0001>

<llo_original>
// kernel: tpu_custom_call.1
$region0: #{tpu_custom_call.1}
  #allocation0 [shape = 'u32[]', space=smem, size = 0x4, offset = 0x4, fixed_abs, tag = 'smem constant byte address 0x4 - core index']
  #allocation1 [shape = 'u32[144,128]{1,0:T(1,128)}', space=vmem, size = 0x12000, scoped, tag = 'internal scratch']
  %s0 = inlined_call_operand.hbm [shape: f32[8,32], index: 0, kind: input, shape index: {}]
  %s1 = inlined_call_operand.hbm [shape: bf16[32,1024], index: 1, kind: input, shape index: {}]
  %s2 = inlined_call_operand.hbm [shape: f32[1,1024], index: 2, kind: input, shape index: {}]
  %s3 = inlined_call_operand.hbm [shape: bf16[1024,128], index: 3, kind: input, shape index: {}]
  %s4 = inlined_call_operand.vmem [shape: f32[1,128], index: 4, kind: input, shape index: {}]
  %s5 = inlined_call_operand.hbm [shape: f32[8,8], index: 5, kind: output, shape index: {}]
  %s6 = sld [smem:[#allocation0]]
  $region46: #{tpu_custom_call.1} parent=0
    _
  %s8 = ssub.s32 1, %s6
  %s9 = scalar_select 0, %s8, %s6
  $region1: #{tpu_custom_call.1} parent=0
    #allocation2 [shape = 'u8[4096]{0}', space=vmem, size = 0x1000, scoped, tag = 'input window, operand 0, single buffered']
    #allocation3 [shape = 's32[1]{0}', space=sflag, size = 0x4, scoped, tag = 'scoped memory for tpu_custom_call.1']
    #allocation4 [shape = 's32[1]{0}', space=sflag, size = 0x4, scoped, tag = 'scoped memory for tpu_custom_call.1']
    #allocation5 [shape = 'u8[65536]{0}', space=vmem, size = 0x10000, scoped, tag = 'input window, operand 1, single buffered']
    #allocation6 [shape = 's32[1]{0}', space=sflag, size = 0x4, scoped, tag = 'scoped memory for tpu_custom_call.1']
    #allocation7 [shape = 'u8[4096]{0}', space=vmem, size = 0x1000, scoped, tag = 'input window, operand 2, single buffered']
    #allocation8 [shape = 'u8[262144]{0}', space=vmem, size = 0x40000, scoped, tag = 'input window, operand 3, single buffered']
    #allocation9 [shape = 's32[1]{0}', space=sflag, size = 0x4, scoped, tag = 'scoped memory for tpu_custom_call.1']
    #allocation10 [shape = 'u8[4096]{0}', space=vmem, size = 0x1000, scoped, tag = 'output window, operand 0, single buffered']
    %10 = vsyncpa [#allocation3], 0
    %11 = vsyncpa [#allocation6], 0
    %12 = vsyncpa [#allocation9], 0
    %13 = vsyncpa [#allocation4], 0
    // Predicated region
    $region2: #{tpu_custom_call.1} parent=1 // pred_check
      _
    $region3: #{tpu_custom_call.1} parent=1 // pred_check_branch
      %15 = sbr.rel (0) target = $region5
    $region4: #{tpu_custom_call.1} parent=1 // pred_region
      %s17 = ssub.s32 128, 128
      %18 = vsyncadd [#allocation3], %s17
      %s20 = sshll.u32 [#allocation2], 4
      %s21 = int_to_ptr.vmem [resolvable:$true] %s20
      %23 = dma.hbm_to_vmem [thread:$0]  %s0, 128, %s21, [#allocation3]
    $region5: #{tpu_custom_call.1} parent=1 // pred_fallthru
      _
    // Predicated region
    $region6: #{tpu_custom_call.1} parent=1 // pred_check
      _
    $region7: #{tpu_custom_call.1} parent=1 // pred_check_branch
      %25 = sbr.rel (0) target = $region9
    $region8: #{tpu_custom_call.1} parent=1 // pred_region
      %s27 = ssub.s32 2048, 2048
      %28 = vsyncadd [#allocation6], %s27
      %s29 = sshll.u32 [#allocation5], 4
      %s30 = int_to_ptr.vmem [resolvable:$true] %s29
      %35 = dma.hbm_to_vmem [thread:$0]  %s1, 2048, %s30, [#allocation6], 512, 512, 32
    $region9: #{tpu_custom_call.1} parent=1 // pred_fallthru
      _
    // Predicated region
    $region10: #{tpu_custom_call.1} parent=1 // pred_check
      _
    $region11: #{tpu_custom_call.1} parent=1 // pred_check_branch
      %37 = sbr.rel (0) target = $region13
    $region12: #{tpu_custom_call.1} parent=1 // pred_region
      %s39 = ssub.s32 128, 128
      %40 = vsyncadd [#allocation6], %s39
      %s42 = sshll.u32 [#allocation7], 4
      %s43 = int_to_ptr.vmem [resolvable:$true] %s42
      %45 = dma.hbm_to_vmem [thread:$0]  %s2, 128, %s43, [#allocation6]
    $region13: #{tpu_custom_call.1} parent=1 // pred_fallthru
      _
    // Predicated region
    $region14: #{tpu_custom_call.1} parent=1 // pred_check
      _
    $region15: #{tpu_custom_call.1} parent=1 // pred_check_branch
      %47 = sbr.rel (0) target = $region17
    $region16: #{tpu_custom_call.1} parent=1 // pred_region
      %s49 = ssub.s32 8192, 8192
      %50 = vsyncadd [#allocation9], %s49
      %s51 = sshll.u32 [#allocation8], 4
      %s52 = int_to_ptr.vmem [resolvable:$true] %s51
      %57 = dma.hbm_to_vmem [thread:$0]  %s3, 8192, %s52, [#allocation9], 64, 64, 4
    $region17: #{tpu_custom_call.1} parent=1 // pred_fallthru
      _
    // Predicated region
    $region18: #{tpu_custom_call.1} parent=1 // pred_check
      _
    $region19: #{tpu_custom_call.1} parent=1 // pred_check_branch
      %59 = sbr.rel (0) target = $region21
    $region20: #{tpu_custom_call.1} parent=1 // pred_region
      _
    $region21: #{tpu_custom_call.1} parent=1 // pred_fallthru
      _
    // Predicated region
    $region22: #{tpu_custom_call.1} parent=1 // pred_check
      _
    $region23: #{tpu_custom_call.1} parent=1 // pred_check_branch
      %61 = sbr.rel (0) target = $region25
    $region24: #{tpu_custom_call.1} parent=1 // pred_region
      %62 = dma.done [#allocation3], 128
    $region25: #{tpu_custom_call.1} parent=1 // pred_fallthru
      _
    // Predicated region
    $region26: #{tpu_custom_call.1} parent=1 // pred_check
      _
    $region27: #{tpu_custom_call.1} parent=1 // pred_check_branch
      %64 = sbr.rel (0) target = $region29
    $region28: #{tpu_custom_call.1} parent=1 // pred_region
      %65 = dma.done [#allocation6], 2048
    $region29: #{tpu_custom_call.1} parent=1 // pred_fallthru
      _
    // Predicated region
    $region30: #{tpu_custom_call.1} parent=1 // pred_check
      _
    $region31: #{tpu_custom_call.1} parent=1 // pred_check_branch
      %67 = sbr.rel (0) target = $region33
    $region32: #{tpu_custom_call.1} parent=1 // pred_region
      %68 = dma.done [#allocation6], 128
    $region33: #{tpu_custom_call.1} parent=1 // pred_fallthru
      _
    // Predicated region
    $region34: #{tpu_custom_call.1} parent=1 // pred_check
      _
    $region35: #{tpu_custom_call.1} parent=1 // pred_check_branch
      %70 = sbr.rel (0) target = $region37
    $region36: #{tpu_custom_call.1} parent=1 // pred_region
      %71 = dma.done [#allocation9], 8192
    $region37: #{tpu_custom_call.1} parent=1 // pred_fallthru
      _
    %v73 = vld [vmem:[#allocation2] sm:$0xff]
    %v74 = vpack.c.bf16 %v73, %v73
    %v75 = vld [vmem:[#allocation5] sm:$0xff]
    %v76 = vld [vmem:[#allocation5 + $0x8] sm:$0xff]
    %v77 = vld [vmem:[#allocation5 + $0x10] sm:$0xff]
    %v78 = vld [vmem:[#allocation5 + $0x18] sm:$0xff]
    %v79 = vld [vmem:[#allocation5 + $0x20] sm:$0xff]
    %v80 = vld [vmem:[#allocation5 + $0x28] sm:$0xff]
    %v81 = vld [vmem:[#allocation5 + $0x30] sm:$0xff]
    %v82 = vld [vmem:[#allocation5 + $0x38] sm:$0xff]
    %v83 = vld [vmem:[#allocation5 + $0x40] sm:$0xff]
    %v84 = vld [vmem:[#allocation5 + $0x48] sm:$0xff]
    %v85 = vld [vmem:[#allocation5 + $0x50] sm:$0xff]
    %v86 = vld [vmem:[#allocation5 + $0x58] sm:$0xff]
    %v87 = vld [vmem:[#allocation5 + $0x60] sm:$0xff]
    %v88 = vld [vmem:[#allocation5 + $0x68] sm:$0xff]
    %v89 = vld [vmem:[#allocation5 + $0x70] sm:$0xff]
    %v90 = vld [vmem:[#allocation5 + $0x78] sm:$0xff]
    %v91 = vld [vmem:[#allocation7] sm:$0xff]
    %v93 = vlaneseq
    %v94 = vshrl.u32 %v93, 7
    %v95 = vsub.s32 0, %v94
    %v96 = vrot.slane %v91, %v95
    %v97 = vlaneseq
    %v98 = vshrl.u32 %v97, 7
    %v99 = vsub.s32 1, %v98
    %v100 = vrot.slane %v91, %v99
    %v101 = vlaneseq
    %v102 = vshrl.u32 %v101, 7
    %v103 = vsub.s32 2, %v102
    %v104 = vrot.slane %v91, %v103
    %v105 = vlaneseq
    %v106 = vshrl.u32 %v105, 7
    %v107 = vsub.s32 3, %v106
    %v108 = vrot.slane %v91, %v107
    %v109 = vlaneseq
    %v110 = vshrl.u32 %v109, 7
    %v111 = vsub.s32 4, %v110
    %v112 = vrot.slane %v91, %v111
    %v113 = vlaneseq
    %v114 = vshrl.u32 %v113, 7
    %v115 = vsub.s32 5, %v114
    %v116 = vrot.slane %v91, %v115
    %v117 = vlaneseq
    %v118 = vshrl.u32 %v117, 7
    %v119 = vsub.s32 6, %v118
    %v120 = vrot.slane %v91, %v119
    %v121 = vlaneseq
    %v122 = vshrl.u32 %v121, 7
    %v123 = vsub.s32 7, %v122
    %v124 = vrot.slane %v91, %v123
    %v149 = vunpack.c.l.b16 %v75
    %v150 = vunpack.c.h.b16 %v75
    %v151 = vunpack.c.l.b16 %v76
    %v152 = vunpack.c.h.b16 %v76
    %v153 = vunpack.c.l.b16 %v77
    %v154 = vunpack.c.h.b16 %v77
    %v155 = vunpack.c.l.b16 %v78
    %v156 = vunpack.c.h.b16 %v78
    %v157 = vunpack.c.l.b16 %v79
    %v158 = vunpack.c.h.b16 %v79
    %v159 = vunpack.c.l.b16 %v80
    %v160 = vunpack.c.h.b16 %v80
    %v161 = vunpack.c.l.b16 %v81
    %v162 = vunpack.c.h.b16 %v81
    %v163 = vunpack.c.l.b16 %v82
    %v164 = vunpack.c.h.b16 %v82
    %v165 = vunpack.c.l.b16 %v83
    %v166 = vunpack.c.h.b16 %v83
    %v167 = vunpack.c.l.b16 %v84
    %v168 = vunpack.c.h.b16 %v84
    %v169 = vunpack.c.l.b16 %v85
    %v170 = vunpack.c.h.b16 %v85
    %v171 = vunpack.c.l.b16 %v86
    %v172 = vunpack.c.h.b16 %v86
    %v173 = vunpack.c.l.b16 %v87
    %v174 = vunpack.c.h.b16 %v87
    %v175 = vunpack.c.l.b16 %v88
    %v176 = vunpack.c.h.b16 %v88
    %v177 = vunpack.c.l.b16 %v89
    %v178 = vunpack.c.h.b16 %v89
    %v179 = vunpack.c.l.b16 %v90
    %v180 = vunpack.c.h.b16 %v90
    %v181 = vpack.c.b16 %v157, %v149
    %v182 = vpack.c.b16 %v158, %v150
    %v183 = vpack.c.b16 %v159, %v151
    %v184 = vpack.c.b16 %v160, %v152
    %v185 = vpack.c.b16 %v161, %v153
    %v186 = vpack.c.b16 %v162, %v154
    %v187 = vpack.c.b16 %v163, %v155
    %v188 = vpack.c.b16 %v164, %v156
    %v189 = vpack.c.b16 %v173, %v165
    %v190 = vpack.c.b16 %v174, %v166
    %v191 = vpack.c.b16 %v175, %v167
    %v192 = vpack.c.b16 %v176, %v168
    %v193 = vpack.c.b16 %v177, %v169
    %v194 = vpack.c.b16 %v178, %v170
    %v195 = vpack.c.b16 %v179, %v171
    %v196 = vpack.c.b16 %v180, %v172
    %vm213 = vcmask 261120
    %v215 = vsel %vm213, %v74, 0
    %217 = vmatprep.subr.bf16.mxu0 %v182
    %218 = vmatpush1.bf16.msra.mxu0 %v181
    %219 = vmatprep.subr.bf16.mxu0 %v190
    %220 = vmatpush1.bf16.msra.mxu0 %v189
    %221 = vmatprep.subr.bf16.mxu0 0
    %222 = vmatpush1.bf16.msra.mxu0 0
    %223 = vmatprep.subr.bf16.mxu0 0
    %224 = vmatpush1.bf16.msra.mxu0 0
    %225 = vmatprep.subr.bf16.mxu0 0
    %226 = vmatpush1.bf16.msra.mxu0 0
    %227 = vmatprep.subr.bf16.mxu0 0
    %228 = vmatpush1.bf16.msra.mxu0 0
    %229 = vmatprep.subr.bf16.mxu0 0
    %230 = vmatpush1.bf16.msra.mxu0 0
    %231 = vmatprep.subr.bf16.mxu0 0
    %232 = vmatpush1.bf16.msra.mxu0 0
    %233 = vmatprep.subr.bf16.mxu0 0
    %234 = vmatpush1.bf16.msra.mxu0 0
    %235 = vmatprep.subr.bf16.mxu0 0
    %236 = vmatpush1.bf16.msra.mxu0 0
    %237 = vmatprep.subr.bf16.mxu0 0
    %238 = vmatpush1.bf16.msra.mxu0 0
    %239 = vmatprep.subr.bf16.mxu0 0
    %240 = vmatpush1.bf16.msra.mxu0 0
    %241 = vmatprep.subr.bf16.mxu0 0
    %242 = vmatpush1.bf16.msra.mxu0 0
    %243 = vmatprep.subr.bf16.mxu0 0
    %244 = vmatpush1.bf16.msra.mxu0 0
    %245 = vmatprep.subr.bf16.mxu0 0
    %246 = vmatpush1.bf16.msra.mxu0 0
    %247 = vmatprep.subr.bf16.mxu0 0
    %248 = vmatpush1.bf16.msra.mxu0 0
    %249 = vmatprep.mubr.bf16.mxu0 0
    %250 = vmatmul.mubr.bf16.gmra.mrb[0].mxu0 %v215
    %v251 = vpop.f32.mrb[0].mxu0
    %v252 = vadd.f32 %v96, %v251
    %v253 = vpop.f32.mrb[0].mxu0
    %v254 = vadd.f32 %v100, %v253
    %v255 = vpop.f32.mrb[0].mxu0
    %v256 = vpop.f32.mrb[0].mxu0
    %257 = vdwg.mxu0
    %258 = vmatprep.subr.bf16.mxu0 %v184
    %259 = vmatpush1.bf16.msra.mxu0 %v183
    %260 = vmatprep.subr.bf16.mxu0 %v192
    %261 = vmatpush1.bf16.msra.mxu0 %v191
    %262 = vmatprep.subr.bf16.mxu0 0
    %263 = vmatpush1.bf16.msra.mxu0 0
    %264 = vmatprep.subr.bf16.mxu0 0
    %265 = vmatpush1.bf16.msra.mxu0 0
    %266 = vmatprep.subr.bf16.mxu0 0
    %267 = vmatpush1.bf16.msra.mxu0 0
    %268 = vmatprep.subr.bf16.mxu0 0
    %269 = vmatpush1.bf16.msra.mxu0 0
    %270 = vmatprep.subr.bf16.mxu0 0
    %271 = vmatpush1.bf16.msra.mxu0 0
    %272 = vmatprep.subr.bf16.mxu0 0
    %273 = vmatpush1.bf16.msra.mxu0 0
    %274 = vmatprep.subr.bf16.mxu0 0
    %275 = vmatpush1.bf16.msra.mxu0 0
    %276 = vmatprep.subr.bf16.mxu0 0
    %277 = vmatpush1.bf16.msra.mxu0 0
    %278 = vmatprep.subr.bf16.mxu0 0
    %279 = vmatpush1.bf16.msra.mxu0 0
    %280 = vmatprep.subr.bf16.mxu0 0
    %281 = vmatpush1.bf16.msra.mxu0 0
    %282 = vmatprep.subr.bf16.mxu0 0
    %283 = vmatpush1.bf16.msra.mxu0 0
    %284 = vmatprep.subr.bf16.mxu0 0
    %285 = vmatpush1.bf16.msra.mxu0 0
    %286 = vmatprep.subr.bf16.mxu0 0
    %287 = vmatpush1.bf16.msra.mxu0 0
    %288 = vmatprep.subr.bf16.mxu0 0
    %289 = vmatpush1.bf16.msra.mxu0 0
    %290 = vmatprep.mubr.bf16.mxu0 0
    %291 = vmatmul.mubr.bf16.gmra.mrb[0].mxu0 %v215
    %v292 = vpop.f32.mrb[0].mxu0
    %v293 = vadd.f32 %v104, %v292
    %v294 = vpop.f32.mrb[0].mxu0
    %v295 = vadd.f32 %v108, %v294
    %v296 = vpop.f32.mrb[0].mxu0
    %v297 = vpop.f32.mrb[0].mxu0
    %298 = vdwg.mxu0
    %299 = vmatprep.subr.bf16.mxu0 %v186
    %300 = vmatpush1.bf16.msra.mxu0 %v185
    %301 = vmatprep.subr.bf16.mxu0 %v194
    %302 = vmatpush1.bf16.msra.mxu0 %v193
    %303 = vmatprep.subr.bf16.mxu0 0
    %304 = vmatpush1.bf16.msra.mxu0 0
    %305 = vmatprep.subr.bf16.mxu0 0
    %306 = vmatpush1.bf16.msra.mxu0 0
    %307 = vmatprep.subr.bf16.mxu0 0
    %308 = vmatpush1.bf16.msra.mxu0 0
    %309 = vmatprep.subr.bf16.mxu0 0
    %310 = vmatpush1.bf16.msra.mxu0 0
    %311 = vmatprep.subr.bf16.mxu0 0
    %312 = vmatpush1.bf16.msra.mxu0 0
    %313 = vmatprep.subr.bf16.mxu0 0
    %314 = vmatpush1.bf16.msra.mxu0 0
    %315 = vmatprep.subr.bf16.mxu0 0
    %316 = vmatpush1.bf16.msra.mxu0 0
    %317 = vmatprep.subr.bf16.mxu0 0
    %318 = vmatpush1.bf16.msra.mxu0 0
    %319 = vmatprep.subr.bf16.mxu0 0
    %320 = vmatpush1.bf16.msra.mxu0 0
    %321 = vmatprep.subr.bf16.mxu0 0
    %322 = vmatpush1.bf16.msra.mxu0 0
    %323 = vmatprep.subr.bf16.mxu0 0
    %324 = vmatpush1.bf16.msra.mxu0 0
    %325 = vmatprep.subr.bf16.mxu0 0
    %326 = vmatpush1.bf16.msra.mxu0 0
    %327 = vmatprep.subr.bf16.mxu0 0
    %328 = vmatpush1.bf16.msra.mxu0 0
    %329 = vmatprep.subr.bf16.mxu0 0
    %330 = vmatpush1.bf16.msra.mxu0 0
    %331 = vmatprep.mubr.bf16.mxu0 0
    %332 = vmatmul.mubr.bf16.gmra.mrb[0].mxu0 %v215
    %v333 = vpop.f32.mrb[0].mxu0
    %v334 = vadd.f32 %v112, %v333
    %v335 = vpop.f32.mrb[0].mxu0
    %v336 = vadd.f32 %v116, %v335
    %v337 = vpop.f32.mrb[0].mxu0
    %v338 = vpop.f32.mrb[0].mxu0
    %339 = vdwg.mxu0
    %340 = vmatprep.subr.bf16.mxu0 %v188
    %341 = vmatpush1.bf16.msra.mxu0 %v187
    %342 = vmatprep.subr.bf16.mxu0 %v196
    %343 = vmatpush1.bf16.msra.mxu0 %v195
    %344 = vmatprep.subr.bf16.mxu0 0
    %345 = vmatpush1.bf16.msra.mxu0 0
    %346 = vmatprep.subr.bf16.mxu0 0
    %347 = vmatpush1.bf16.msra.mxu0 0
    %348 = vmatprep.subr.bf16.mxu0 0
    %349 = vmatpush1.bf16.msra.mxu0 0
    %350 = vmatprep.subr.bf16.mxu0 0
    %351 = vmatpush1.bf16.msra.mxu0 0
    %352 = vmatprep.subr.bf16.mxu0 0
    %353 = vmatpush1.bf16.msra.mxu0 0
    %354 = vmatprep.subr.bf16.mxu0 0
    %355 = vmatpush1.bf16.msra.mxu0 0
    %356 = vmatprep.subr.bf16.mxu0 0
    %357 = vmatpush1.bf16.msra.mxu0 0
    %358 = vmatprep.subr.bf16.mxu0 0
    %359 = vmatpush1.bf16.msra.mxu0 0
    %360 = vmatprep.subr.bf16.mxu0 0
    %361 = vmatpush1.bf16.msra.mxu0 0
    %362 = vmatprep.subr.bf16.mxu0 0
    %363 = vmatpush1.bf16.msra.mxu0 0
    %364 = vmatprep.subr.bf16.mxu0 0
    %365 = vmatpush1.bf16.msra.mxu0 0
    %366 = vmatprep.subr.bf16.mxu0 0
    %367 = vmatpush1.bf16.msra.mxu0 0
    %368 = vmatprep.subr.bf16.mxu0 0
    %369 = vmatpush1.bf16.msra.mxu0 0
    %370 = vmatprep.subr.bf16.mxu0 0
    %371 = vmatpush1.bf16.msra.mxu0 0
    %372 = vmatprep.mubr.bf16.mxu0 0
    %373 = vmatmul.mubr.bf16.gmra.mrb[0].mxu0 %v215
    %v374 = vpop.f32.mrb[0].mxu0
    %v375 = vadd.f32 %v120, %v374
    %v376 = vpop.f32.mrb[0].mxu0
    %v377 = vadd.f32 %v124, %v376
    %v378 = vpop.f32.mrb[0].mxu0
    %v379 = vpop.f32.mrb[0].mxu0
    %380 = vdwg.mxu0
    %v381 = vmax.f32 %v252, 0.0
    %v382 = vmax.f32 %v254, 0.0
    %v383 = vmax.f32 %v293, 0.0
    %v384 = vmax.f32 %v295, 0.0
    %v385 = vmax.f32 %v334, 0.0
    %v386 = vmax.f32 %v336, 0.0
    %v387 = vmax.f32 %v375, 0.0
    %v388 = vmax.f32 %v377, 0.0
    %v389 = vpack.c.bf16 %v381, %v381
    %v390 = vpack.c.bf16 %v382, %v382
    %v391 = vpack.c.bf16 %v383, %v383
    %v392 = vpack.c.bf16 %v384, %v384
    %v393 = vpack.c.bf16 %v385, %v385
    %v394 = vpack.c.bf16 %v386, %v386
    %v395 = vpack.c.bf16 %v387, %v387
    %v396 = vpack.c.bf16 %v388, %v388
    %v397 = vld [vmem:[#allocation8] sm:$0xf]
    %v398 = vld [vmem:[#allocation8 + $0x4] sm:$0xf]
    %v399 = vld [vmem:[#allocation8 + $0x8] sm:$0xf]
    %v400 = vld [vmem:[#allocation8 + $0xc] sm:$0xf]
    %v401 = vld [vmem:[#allocation8 + $0x10] sm:$0xf]
    %v402 = vld [vmem:[#allocation8 + $0x14] sm:$0xf]
    %v403 = vld [vmem:[#allocation8 + $0x18] sm:$0xf]
    %v404 = vld [vmem:[#allocation8 + $0x1c] sm:$0xf]
    %v405 = vld [vmem:[#allocation8 + $0x20] sm:$0xf]
    %v406 = vld [vmem:[#allocation8 + $0x24] sm:$0xf]
    %v407 = vld [vmem:[#allocation8 + $0x28] sm:$0xf]
    %v408 = vld [vmem:[#allocation8 + $0x2c] sm:$0xf]
    %v409 = vld [vmem:[#allocation8 + $0x30] sm:$0xf]
    %v410 = vld [vmem:[#allocation8 + $0x34] sm:$0xf]
    %v411 = vld [vmem:[#allocation8 + $0x38] sm:$0xf]
    %v412 = vld [vmem:[#allocation8 + $0x3c] sm:$0xf]
    %v413 = vld [vmem:[#allocation8 + $0x40] sm:$0xf]
    %v414 = vld [vmem:[#allocation8 + $0x44] sm:$0xf]
    %v415 = vld [vmem:[#allocation8 + $0x48] sm:$0xf]
    %v416 = vld [vmem:[#allocation8 + $0x4c] sm:$0xf]
    %v417 = vld [vmem:[#allocation8 + $0x50] sm:$0xf]
    %v418 = vld [vmem:[#allocation8 + $0x54] sm:$0xf]
    %v419 = vld [vmem:[#allocation8 + $0x58] sm:$0xf]
    %v420 = vld [vmem:[#allocation8 + $0x5c] sm:$0xf]
    %v421 = vld [vmem:[#allocation8 + $0x60] sm:$0xf]
    %v422 = vld [vmem:[#allocation8 + $0x64] sm:$0xf]
    %v423 = vld [vmem:[#allocation8 + $0x68] sm:$0xf]
    %v424 = vld [vmem:[#allocation8 + $0x6c] sm:$0xf]
    %v425 = vld [vmem:[#allocation8 + $0x70] sm:$0xf]
    %v426 = vld [vmem:[#allocation8 + $0x74] sm:$0xf]
    %v427 = vld [vmem:[#allocation8 + $0x78] sm:$0xf]
    %v428 = vld [vmem:[#allocation8 + $0x7c] sm:$0xf]
    %v429 = vld [vmem:[#allocation8 + $0x80] sm:$0xf]
    %v430 = vld [vmem:[#allocation8 + $0x84] sm:$0xf]
    %v431 = vld [vmem:[#allocation8 + $0x88] sm:$0xf]
    %v432 = vld [vmem:[#allocation8 + $0x8c] sm:$0xf]
    %v433 = vld [vmem:[#allocation8 + $0x90] sm:$0xf]
    %v434 = vld [vmem:[#allocation8 + $0x94] sm:$0xf]
    %v435 = vld [vmem:[#allocation8 + $0x98] sm:$0xf]
    %v436 = vld [vmem:[#allocation8 + $0x9c] sm:$0xf]
    %v437 = vld [vmem:[#allocation8 + $0xa0] sm:$0xf]
    %v438 = vld [vmem:[#allocation8 + $0xa4] sm:$0xf]
    %v439 = vld [vmem:[#allocation8 + $0xa8] sm:$0xf]
    %v440 = vld [vmem:[#allocation8 + $0xac] sm:$0xf]
    %v441 = vld [vmem:[#allocation8 + $0xb0] sm:$0xf]
    %v442 = vld [vmem:[#allocation8 + $0xb4] sm:$0xf]
    %v443 = vld [vmem:[#allocation8 + $0xb8] sm:$0xf]
    %v444 = vld [vmem:[#allocation8 + $0xbc] sm:$0xf]
    %v445 = vld [vmem:[#allocation8 + $0xc0] sm:$0xf]
    %v446 = vld [vmem:[#allocation8 + $0xc4] sm:$0xf]
    %v447 = vld [vmem:[#allocation8 + $0xc8] sm:$0xf]
    %v448 = vld [vmem:[#allocation8 + $0xcc] sm:$0xf]
    %v449 = vld [vmem:[#allocation8 + $0xd0] sm:$0xf]
    %v450 = vld [vmem:[#allocation8 + $0xd4] sm:$0xf]
    %v451 = vld [vmem:[#allocation8 + $0xd8] sm:$0xf]
    %v452 = vld [vmem:[#allocation8 + $0xdc] sm:$0xf]
    %v453 = vld [vmem:[#allocation8 + $0xe0] sm:$0xf]
    %v454 = vld [vmem:[#allocation8 + $0xe4] sm:$0xf]
    %v455 = vld [vmem:[#allocation8 + $0xe8] sm:$0xf]
    %v456 = vld [vmem:[#allocation8 + $0xec] sm:$0xf]
    %v457 = vld [vmem:[#allocation8 + $0xf0] sm:$0xf]
    %v458 = vld [vmem:[#allocation8 + $0xf4] sm:$0xf]
    %v459 = vld [vmem:[#allocation8 + $0xf8] sm:$0xf]
    %v460 = vld [vmem:[#allocation8 + $0xfc] sm:$0xf]
    %v461 = vld [vmem:[#allocation8 + $0x100] sm:$0xf]
    %v462 = vld [vmem:[#allocation8 + $0x104] sm:$0xf]
    %v463 = vld [vmem:[#allocation8 + $0x108] sm:$0xf]
    %v464 = vld [vmem:[#allocation8 + $0x10c] sm:$0xf]
    %v465 = vld [vmem:[#allocation8 + $0x110] sm:$0xf]
    %v466 = vld [vmem:[#allocation8 + $0x114] sm:$0xf]
    %v467 = vld [vmem:[#allocation8 + $0x118] sm:$0xf]
    %v468 = vld [vmem:[#allocation8 + $0x11c] sm:$0xf]
    %v469 = vld [vmem:[#allocation8 + $0x120] sm:$0xf]
    %v470 = vld [vmem:[#allocation8 + $0x124] sm:$0xf]
    %v471 = vld [vmem:[#allocation8 + $0x128] sm:$0xf]
    %v472 = vld [vmem:[#allocation8 + $0x12c] sm:$0xf]
    %v473 = vld [vmem:[#allocation8 + $0x130] sm:$0xf]
    %v474 = vld [vmem:[#allocation8 + $0x134] sm:$0xf]
    %v475 = vld [vmem:[#allocation8 + $0x138] sm:$0xf]
    %v476 = vld [vmem:[#allocation8 + $0x13c] sm:$0xf]
    %v477 = vld [vmem:[#allocation8 + $0x140] sm:$0xf]
    %v478 = vld [vmem:[#allocation8 + $0x144] sm:$0xf]
    %v479 = vld [vmem:[#allocation8 + $0x148] sm:$0xf]
    %v480 = vld [vmem:[#allocation8 + $0x14c] sm:$0xf]
    %v481 = vld [vmem:[#allocation8 + $0x150] sm:$0xf]
    %v482 = vld [vmem:[#allocation8 + $0x154] sm:$0xf]
    %v483 = vld [vmem:[#allocation8 + $0x158] sm:$0xf]
    %v484 = vld [vmem:[#allocation8 + $0x15c] sm:$0xf]
    %v485 = vld [vmem:[#allocation8 + $0x160] sm:$0xf]
    %v486 = vld [vmem:[#allocation8 + $0x164] sm:$0xf]
    %v487 = vld [vmem:[#allocation8 + $0x168] sm:$0xf]
    %v488 = vld [vmem:[#allocation8 + $0x16c] sm:$0xf]
    %v489 = vld [vmem:[#allocation8 + $0x170] sm:$0xf]
    %v490 = vld [vmem:[#allocation8 + $0x174] sm:$0xf]
    %v491 = vld [vmem:[#allocation8 + $0x178] sm:$0xf]
    %v492 = vld [vmem:[#allocation8 + $0x17c] sm:$0xf]
    %v493 = vld [vmem:[#allocation8 + $0x180] sm:$0xf]
    %v494 = vld [vmem:[#allocation8 + $0x184] sm:$0xf]
    %v495 = vld [vmem:[#allocation8 + $0x188] sm:$0xf]
    %v496 = vld [vmem:[#allocation8 + $0x18c] sm:$0xf]
    %v497 = vld [vmem:[#allocation8 + $0x190] sm:$0xf]
    %v498 = vld [vmem:[#allocation8 + $0x194] sm:$0xf]
    %v499 = vld [vmem:[#allocation8 + $0x198] sm:$0xf]
    %v500 = vld [vmem:[#allocation8 + $0x19c] sm:$0xf]
    %v501 = vld [vmem:[#allocation8 + $0x1a0] sm:$0xf]
    %v502 = vld [vmem:[#allocation8 + $0x1a4] sm:$0xf]
    %v503 = vld [vmem:[#allocation8 + $0x1a8] sm:$0xf]
    %v504 = vld [vmem:[#allocation8 + $0x1ac] sm:$0xf]
    %v505 = vld [vmem:[#allocation8 + $0x1b0] sm:$0xf]
    %v506 = vld [vmem:[#allocation8 + $0x1b4] sm:$0xf]
    %v507 = vld [vmem:[#allocation8 + $0x1b8] sm:$0xf]
    %v508 = vld [vmem:[#allocation8 + $0x1bc] sm:$0xf]
    %v509 = vld [vmem:[#allocation8 + $0x1c0] sm:$0xf]
    %v510 = vld [vmem:[#allocation8 + $0x1c4] sm:$0xf]
    %v511 = vld [vmem:[#allocation8 + $0x1c8] sm:$0xf]
    %v512 = vld [vmem:[#allocation8 + $0x1cc] sm:$0xf]
    %v513 = vld [vmem:[#allocation8 + $0x1d0] sm:$0xf]
    %v514 = vld [vmem:[#allocation8 + $0x1d4] sm:$0xf]
    %v515 = vld [vmem:[#allocation8 + $0x1d8] sm:$0xf]
    %v516 = vld [vmem:[#allocation8 + $0x1dc] sm:$0xf]
    %v517 = vld [vmem:[#allocation8 + $0x1e0] sm:$0xf]
    %v518 = vld [vmem:[#allocation8 + $0x1e4] sm:$0xf]
    %v519 = vld [vmem:[#allocation8 + $0x1e8] sm:$0xf]
    %v520 = vld [vmem:[#allocation8 + $0x1ec] sm:$0xf]
    %v521 = vld [vmem:[#allocation8 + $0x1f0] sm:$0xf]
    %v522 = vld [vmem:[#allocation8 + $0x1f4] sm:$0xf]
    %v523 = vld [vmem:[#allocation8 + $0x1f8] sm:$0xf]
    %v524 = vld [vmem:[#allocation8 + $0x1fc] sm:$0xf]
    %v525 = vld [vmem:[%s4] sm:$0x1]
    %v527 = vlaneseq
    %v528 = vshrl.u32 %v527, 7
    %v529 = vsub.s32 0, %v528
    %v530 = vrot.slane %v525, %v529
    %v660 = vunpack.c.l.b16 %v397
    %v661 = vunpack.c.l.b16 %v398
    %v662 = vunpack.c.l.b16 %v399
    %v663 = vunpack.c.l.b16 %v400
    %v664 = vunpack.c.l.b16 %v401
    %v665 = vunpack.c.l.b16 %v402
    %v666 = vunpack.c.l.b16 %v403
    %v667 = vunpack.c.l.b16 %v404
    %v668 = vunpack.c.l.b16 %v405
    %v669 = vunpack.c.l.b16 %v406
    %v670 = vunpack.c.l.b16 %v407
    %v671 = vunpack.c.l.b16 %v408
    %v672 = vunpack.c.l.b16 %v409
    %v673 = vunpack.c.l.b16 %v410
    %v674 = vunpack.c.l.b16 %v411
    %v675 = vunpack.c.l.b16 %v412
    %v676 = vunpack.c.l.b16 %v413
    %v677 = vunpack.c.l.b16 %v414
    %v678 = vunpack.c.l.b16 %v415
    %v679 = vunpack.c.l.b16 %v416
    %v680 = vunpack.c.l.b16 %v417
    %v681 = vunpack.c.l.b16 %v418
    %v682 = vunpack.c.l.b16 %v419
    %v683 = vunpack.c.l.b16 %v420
    %v684 = vunpack.c.l.b16 %v421
    %v685 = vunpack.c.l.b16 %v422
    %v686 = vunpack.c.l.b16 %v423
    %v687 = vunpack.c.l.b16 %v424
    %v688 = vunpack.c.l.b16 %v425
    %v689 = vunpack.c.l.b16 %v426
    %v690 = vunpack.c.l.b16 %v427
    %v691 = vunpack.c.l.b16 %v428
    %v692 = vunpack.c.l.b16 %v429
    %v693 = vunpack.c.l.b16 %v430
    %v694 = vunpack.c.l.b16 %v431
    %v695 = vunpack.c.l.b16 %v432
    %v696 = vunpack.c.l.b16 %v433
    %v697 = vunpack.c.l.b16 %v434
    %v698 = vunpack.c.l.b16 %v435
    %v699 = vunpack.c.l.b16 %v436
    %v700 = vunpack.c.l.b16 %v437
    %v701 = vunpack.c.l.b16 %v438
    %v702 = vunpack.c.l.b16 %v439
    %v703 = vunpack.c.l.b16 %v440
    %v704 = vunpack.c.l.b16 %v441
    %v705 = vunpack.c.l.b16 %v442
    %v706 = vunpack.c.l.b16 %v443
    %v707 = vunpack.c.l.b16 %v444
    %v708 = vunpack.c.l.b16 %v445
    %v709 = vunpack.c.l.b16 %v446
    %v710 = vunpack.c.l.b16 %v447
    %v711 = vunpack.c.l.b16 %v448
    %v712 = vunpack.c.l.b16 %v449
    %v713 = vunpack.c.l.b16 %v450
    %v714 = vunpack.c.l.b16 %v451
    %v715 = vunpack.c.l.b16 %v452
    %v716 = vunpack.c.l.b16 %v453
    %v717 = vunpack.c.l.b16 %v454
    %v718 = vunpack.c.l.b16 %v455
    %v719 = vunpack.c.l.b16 %v456
    %v720 = vunpack.c.l.b16 %v457
    %v721 = vunpack.c.l.b16 %v458
    %v722 = vunpack.c.l.b16 %v459
    %v723 = vunpack.c.l.b16 %v460
    %v724 = vunpack.c.l.b16 %v461
    %v725 = vunpack.c.l.b16 %v462
    %v726 = vunpack.c.l.b16 %v463
    %v727 = vunpack.c.l.b16 %v464
    %v728 = vunpack.c.l.b16 %v465
    %v729 = vunpack.c.l.b16 %v466
    %v730 = vunpack.c.l.b16 %v467
    %v731 = vunpack.c.l.b16 %v468
    %v732 = vunpack.c.l.b16 %v469
    %v733 = vunpack.c.l.b16 %v470
    %v734 = vunpack.c.l.b16 %v471
    %v735 = vunpack.c.l.b16 %v472
    %v736 = vunpack.c.l.b16 %v473
    %v737 = vunpack.c.l.b16 %v474
    %v738 = vunpack.c.l.b16 %v475
    %v739 = vunpack.c.l.b16 %v476
    %v740 = vunpack.c.l.b16 %v477
    %v741 = vunpack.c.l.b16 %v478
    %v742 = vunpack.c.l.b16 %v479
    %v743 = vunpack.c.l.b16 %v480
    %v744 = vunpack.c.l.b16 %v481
    %v745 = vunpack.c.l.b16 %v482
    %v746 = vunpack.c.l.b16 %v483
    %v747 = vunpack.c.l.b16 %v484
    %v748 = vunpack.c.l.b16 %v485
    %v749 = vunpack.c.l.b16 %v486
    %v750 = vunpack.c.l.b16 %v487
    %v751 = vunpack.c.l.b16 %v488
    %v752 = vunpack.c.l.b16 %v489
    %v753 = vunpack.c.l.b16 %v490
    %v754 = vunpack.c.l.b16 %v491
    %v755 = vunpack.c.l.b16 %v492
    %v756 = vunpack.c.l.b16 %v493
    %v757 = vunpack.c.l.b16 %v494
    %v758 = vunpack.c.l.b16 %v495
    %v759 = vunpack.c.l.b16 %v496
    %v760 = vunpack.c.l.b16 %v497
    %v761 = vunpack.c.l.b16 %v498
    %v762 = vunpack.c.l.b16 %v499
    %v763 = vunpack.c.l.b16 %v500
    %v764 = vunpack.c.l.b16 %v501
    %v765 = vunpack.c.l.b16 %v502
    %v766 = vunpack.c.l.b16 %v503
    %v767 = vunpack.c.l.b16 %v504
    %v768 = vunpack.c.l.b16 %v505
    %v769 = vunpack.c.l.b16 %v506
    %v770 = vunpack.c.l.b16 %v507
    %v771 = vunpack.c.l.b16 %v508
    %v772 = vunpack.c.l.b16 %v509
    %v773 = vunpack.c.l.b16 %v510
    %v774 = vunpack.c.l.b16 %v511
    %v775 = vunpack.c.l.b16 %v512
    %v776 = vunpack.c.l.b16 %v513
    %v777 = vunpack.c.l.b16 %v514
    %v778 = vunpack.c.l.b16 %v515
    %v779 = vunpack.c.l.b16 %v516
    %v780 = vunpack.c.l.b16 %v517
    %v781 = vunpack.c.l.b16 %v518
    %v782 = vunpack.c.l.b16 %v519
    %v783 = vunpack.c.l.b16 %v520
    %v784 = vunpack.c.l.b16 %v521
    %v785 = vunpack.c.l.b16 %v522
    %v786 = vunpack.c.l.b16 %v523
    %v787 = vunpack.c.l.b16 %v524
    %v788 = vpack.c.b16 %v661, %v660
    %v789 = vpack.c.b16 %v663, %v662
    %v790 = vpack.c.b16 %v665, %v664
    %v791 = vpack.c.b16 %v667, %v666
    %v792 = vpack.c.b16 %v669, %v668
    %v793 = vpack.c.b16 %v671, %v670
    %v794 = vpack.c.b16 %v673, %v672
    %v795 = vpack.c.b16 %v675, %v674
    %v796 = vpack.c.b16 %v677, %v676
    %v797 = vpack.c.b16 %v679, %v678
    %v798 = vpack.c.b16 %v681, %v680
    %v799 = vpack.c.b16 %v683, %v682
    %v800 = vpack.c.b16 %v685, %v684
    %v801 = vpack.c.b16 %v687, %v686
    %v802 = vpack.c.b16 %v689, %v688
    %v803 = vpack.c.b16 %v691, %v690
    %v804 = vpack.c.b16 %v693, %v692
    %v805 = vpack.c.b16 %v695, %v694
    %v806 = vpack.c.b16 %v697, %v696
    %v807 = vpack.c.b16 %v699, %v698
    %v808 = vpack.c.b16 %v701, %v700
    %v809 = vpack.c.b16 %v703, %v702
    %v810 = vpack.c.b16 %v705, %v704
    %v811 = vpack.c.b16 %v707, %v706
    %v812 = vpack.c.b16 %v709, %v708
    %v813 = vpack.c.b16 %v711, %v710
    %v814 = vpack.c.b16 %v713, %v712
    %v815 = vpack.c.b16 %v715, %v714
    %v816 = vpack.c.b16 %v717, %v716
    %v817 = vpack.c.b16 %v719, %v718
    %v818 = vpack.c.b16 %v721, %v720
    %v819 = vpack.c.b16 %v723, %v722
    %v820 = vpack.c.b16 %v725, %v724
    %v821 = vpack.c.b16 %v727, %v726
    %v822 = vpack.c.b16 %v729, %v728
    %v823 = vpack.c.b16 %v731, %v730
    %v824 = vpack.c.b16 %v733, %v732
    %v825 = vpack.c.b16 %v735, %v734
    %v826 = vpack.c.b16 %v737, %v736
    %v827 = vpack.c.b16 %v739, %v738
    %v828 = vpack.c.b16 %v741, %v740
    %v829 = vpack.c.b16 %v743, %v742
    %v830 = vpack.c.b16 %v745, %v744
    %v831 = vpack.c.b16 %v747, %v746
    %v832 = vpack.c.b16 %v749, %v748
    %v833 = vpack.c.b16 %v751, %v750
    %v834 = vpack.c.b16 %v753, %v752
    %v835 = vpack.c.b16 %v755, %v754
    %v836 = vpack.c.b16 %v757, %v756
    %v837 = vpack.c.b16 %v759, %v758
    %v838 = vpack.c.b16 %v761, %v760
    %v839 = vpack.c.b16 %v763, %v762
    %v840 = vpack.c.b16 %v765, %v764
    %v841 = vpack.c.b16 %v767, %v766
    %v842 = vpack.c.b16 %v769, %v768
    %v843 = vpack.c.b16 %v771, %v770
    %v844 = vpack.c.b16 %v773, %v772
    %v845 = vpack.c.b16 %v775, %v774
    %v846 = vpack.c.b16 %v777, %v776
    %v847 = vpack.c.b16 %v779, %v778
    %v848 = vpack.c.b16 %v781, %v780
    %v849 = vpack.c.b16 %v783, %v782
    %v850 = vpack.c.b16 %v785, %v784
    %v851 = vpack.c.b16 %v787, %v786
    %916 = vmatprep.subr.bf16.mxu0 0
    %917 = vmatpush1.bf16.msra.mxu0 %v788
    %918 = vmatprep.subr.bf16.mxu0 0
    %919 = vmatpush1.bf16.msra.mxu0 %v789
    %920 = vmatprep.subr.bf16.mxu0 0
    %921 = vmatpush1.bf16.msra.mxu0 %v790
    %922 = vmatprep.subr.bf16.mxu0 0
    %923 = vmatpush1.bf16.msra.mxu0 %v791
    %924 = vmatprep.subr.bf16.mxu0 0
    %925 = vmatpush1.bf16.msra.mxu0 %v792
    %926 = vmatprep.subr.bf16.mxu0 0
    %927 = vmatpush1.bf16.msra.mxu0 %v793
    %928 = vmatprep.subr.bf16.mxu0 0
    %929 = vmatpush1.bf16.msra.mxu0 %v794
    %930 = vmatprep.subr.bf16.mxu0 0
    %931 = vmatpush1.bf16.msra.mxu0 %v795
    %932 = vmatprep.subr.bf16.mxu0 0
    %933 = vmatpush1.bf16.msra.mxu0 %v796
    %934 = vmatprep.subr.bf16.mxu0 0
    %935 = vmatpush1.bf16.msra.mxu0 %v797
    %936 = vmatprep.subr.bf16.mxu0 0
    %937 = vmatpush1.bf16.msra.mxu0 %v798
    %938 = vmatprep.subr.bf16.mxu0 0
    %939 = vmatpush1.bf16.msra.mxu0 %v799
    %940 = vmatprep.subr.bf16.mxu0 0
    %941 = vmatpush1.bf16.msra.mxu0 %v800
    %942 = vmatprep.subr.bf16.mxu0 0
    %943 = vmatpush1.bf16.msra.mxu0 %v801
    %944 = vmatprep.subr.bf16.mxu0 0
    %945 = vmatpush1.bf16.msra.mxu0 %v802
    %946 = vmatprep.subr.bf16.mxu0 0
    %947 = vmatpush1.bf16.msra.mxu0 %v803
    %948 = vmatprep.mubr.bf16.mxu0 %v390
    %949 = vmatmul.mubr.bf16.gmra.mrb[0].mxu0 %v389
    %v950 = vpop.f32.mrb[0].mxu0
    %v951 = vadd.f32 %v530, %v950
    %v952 = vpop.f32.mrb[0].mxu0
    %v953 = vpop.f32.mrb[0].mxu0
    %v954 = vpop.f32.mrb[0].mxu0
    %955 = vdwg.mxu0
    %956 = vmatprep.subr.bf16.mxu0 0
    %957 = vmatpush1.bf16.msra.mxu0 %v804
    %958 = vmatprep.subr.bf16.mxu0 0
    %959 = vmatpush1.bf16.msra.mxu0 %v805
    %960 = vmatprep.subr.bf16.mxu0 0
    %961 = vmatpush1.bf16.msra.mxu0 %v806
    %962 = vmatprep.subr.bf16.mxu0 0
    %963 = vmatpush1.bf16.msra.mxu0 %v807
    %964 = vmatprep.subr.bf16.mxu0 0
    %965 = vmatpush1.bf16.msra.mxu0 %v808
    %966 = vmatprep.subr.bf16.mxu0 0
    %967 = vmatpush1.bf16.msra.mxu0 %v809
    %968 = vmatprep.subr.bf16.mxu0 0
    %969 = vmatpush1.bf16.msra.mxu0 %v810
    %970 = vmatprep.subr.bf16.mxu0 0
    %971 = vmatpush1.bf16.msra.mxu0 %v811
    %972 = vmatprep.subr.bf16.mxu0 0
    %973 = vmatpush1.bf16.msra.mxu0 %v812
    %974 = vmatprep.subr.bf16.mxu0 0
    %975 = vmatpush1.bf16.msra.mxu0 %v813
    %976 = vmatprep.subr.bf16.mxu0 0
    %977 = vmatpush1.bf16.msra.mxu0 %v814
    %978 = vmatprep.subr.bf16.mxu0 0
    %979 = vmatpush1.bf16.msra.mxu0 %v815
    %980 = vmatprep.subr.bf16.mxu0 0
    %981 = vmatpush1.bf16.msra.mxu0 %v816
    %982 = vmatprep.subr.bf16.mxu0 0
    %983 = vmatpush1.bf16.msra.mxu0 %v817
    %984 = vmatprep.subr.bf16.mxu0 0
    %985 = vmatpush1.bf16.msra.mxu0 %v818
    %986 = vmatprep.subr.bf16.mxu0 0
    %987 = vmatpush1.bf16.msra.mxu0 %v819
    %988 = vmatprep.mubr.bf16.mxu0 %v392
    %989 = vmatmul.mubr.bf16.gmra.mrb[0].mxu0 %v391
    %v990 = vpop.f32.mrb[0].mxu0
    %v991 = vadd.f32 %v951, %v990
    %v992 = vpop.f32.mrb[0].mxu0
    %v993 = vpop.f32.mrb[0].mxu0
    %v994 = vpop.f32.mrb[0].mxu0
    %995 = vdwg.mxu0
    %996 = vmatprep.subr.bf16.mxu0 0
    %997 = vmatpush1.bf16.msra.mxu0 %v820
    %998 = vmatprep.subr.bf16.mxu0 0
    %999 = vmatpush1.bf16.msra.mxu0 %v821
    %1000 = vmatprep.subr.bf16.mxu0 0
    %1001 = vmatpush1.bf16.msra.mxu0 %v822
    %1002 = vmatprep.subr.bf16.mxu0 0
    %1003 = vmatpush1.bf16.msra.mxu0 %v823
    %1004 = vmatprep.subr.bf16.mxu0 0
    %1005 = vmatpush1.bf16.msra.mxu0 %v824
    %1006 = vmatprep.subr.bf16.mxu0 0
    %1007 = vmatpush1.bf16.msra.mxu0 %v825
    %1008 = vmatprep.subr.bf16.mxu0 0
    %1009 = vmatpush1.bf16.msra.mxu0 %v826
    %1010 = vmatprep.subr.bf16.mxu0 0
    %1011 = vmatpush1.bf16.msra.mxu0 %v827
    %1012 = vmatprep.subr.bf16.mxu0 0
    %1013 = vmatpush1.bf16.msra.mxu0 %v828
    %1014 = vmatprep.subr.bf16.mxu0 0
    %1015 = vmatpush1.bf16.msra.mxu0 %v829
    %1016 = vmatprep.subr.bf16.mxu0 0
    %1017 = vmatpush1.bf16.msra.mxu0 %v830
    %1018 = vmatprep.subr.bf16.mxu0 0
    %1019 = vmatpush1.bf16.msra.mxu0 %v831
    %1020 = vmatprep.subr.bf16.mxu0 0
    %1021 = vmatpush1.bf16.msra.mxu0 %v832
    %1022 = vmatprep.subr.bf16.mxu0 0
    %1023 = vmatpush1.bf16.msra.mxu0 %v833
    %1024 = vmatprep.subr.bf16.mxu0 0
    %1025 = vmatpush1.bf16.msra.mxu0 %v834
    %1026 = vmatprep.subr.bf16.mxu0 0
    %1027 = vmatpush1.bf16.msra.mxu0 %v835
    %1028 = vmatprep.mubr.bf16.mxu0 %v394
    %1029 = vmatmul.mubr.bf16.gmra.mrb[0].mxu0 %v393
    %v1030 = vpop.f32.mrb[0].mxu0
    %v1031 = vadd.f32 %v991, %v1030
    %v1032 = vpop.f32.mrb[0].mxu0
    %v1033 = vpop.f32.mrb[0].mxu0
    %v1034 = vpop.f32.mrb[0].mxu0
    %1035 = vdwg.mxu0
    %1036 = vmatprep.subr.bf16.mxu0 0
    %1037 = vmatpush1.bf16.msra.mxu0 %v836
    %1038 = vmatprep.subr.bf16.mxu0 0
    %1039 = vmatpush1.bf16.msra.mxu0 %v837
    %1040 = vmatprep.subr.bf16.mxu0 0
    %1041 = vmatpush1.bf16.msra.mxu0 %v838
    %1042 = vmatprep.subr.bf16.mxu0 0
    %1043 = vmatpush1.bf16.msra.mxu0 %v839
    %1044 = vmatprep.subr.bf16.mxu0 0
    %1045 = vmatpush1.bf16.msra.mxu0 %v840
    %1046 = vmatprep.subr.bf16.mxu0 0
    %1047 = vmatpush1.bf16.msra.mxu0 %v841
    %1048 = vmatprep.subr.bf16.mxu0 0
    %1049 = vmatpush1.bf16.msra.mxu0 %v842
    %1050 = vmatprep.subr.bf16.mxu0 0
    %1051 = vmatpush1.bf16.msra.mxu0 %v843
    %1052 = vmatprep.subr.bf16.mxu0 0
    %1053 = vmatpush1.bf16.msra.mxu0 %v844
    %1054 = vmatprep.subr.bf16.mxu0 0
    %1055 = vmatpush1.bf16.msra.mxu0 %v845
    %1056 = vmatprep.subr.bf16.mxu0 0
    %1057 = vmatpush1.bf16.msra.mxu0 %v846
    %1058 = vmatprep.subr.bf16.mxu0 0
    %1059 = vmatpush1.bf16.msra.mxu0 %v847
    %1060 = vmatprep.subr.bf16.mxu0 0
    %1061 = vmatpush1.bf16.msra.mxu0 %v848
    %1062 = vmatprep.subr.bf16.mxu0 0
    %1063 = vmatpush1.bf16.msra.mxu0 %v849
    %1064 = vmatprep.subr.bf16.mxu0 0
    %1065 = vmatpush1.bf16.msra.mxu0 %v850
    %1066 = vmatprep.subr.bf16.mxu0 0
    %1067 = vmatpush1.bf16.msra.mxu0 %v851
    %1068 = vmatprep.mubr.bf16.mxu0 %v396
    %1069 = vmatmul.mubr.bf16.gmra.mrb[0].mxu0 %v395
    %v1070 = vpop.f32.mrb[0].mxu0
    %v1071 = vadd.f32 %v1031, %v1070
    %v1072 = vpop.f32.mrb[0].mxu0
    %v1073 = vpop.f32.mrb[0].mxu0
    %v1074 = vpop.f32.mrb[0].mxu0
    %1075 = vdwg.mxu0
    %1076 = vadd.xlane.f32.xlu0 %v1071
    %v1077 = vpop.xlane.xlu0 %1076
    %v1078 = vlaneseq
    %v1079 = vand.u32 %v1078, 127
    %vm1080 = vcmp.eq.s32.totalorder %v1079, 8
    %v1081 = vsel %vm1080, %v1071, 0.0
    %1082 = vadd.xlane.f32.xlu0 %v1081
    %v1083 = vpop.xlane.xlu0 %1082
    %v1084 = vsub.f32 %v1077, %v1083
    %v1085 = vmul.f32 %v1084, 0.125
    %v1086 = vadd.f32 %v1071, %v1083
    %v1087 = vsub.f32 %v1086, %v1085
    %vm1088 = vcmask 64512
    %1089 = vst.msk [vmem:[#allocation10] sm:$0xff] %vm1088, %v1087
    // Predicated region
    $region38: #{tpu_custom_call.1} parent=1 // pred_check
      _
    $region39: #{tpu_custom_call.1} parent=1 // pred_check_branch
      %1091 = sbr.rel (0) target = $region41
    $region40: #{tpu_custom_call.1} parent=1 // pred_region
      %s1093 = ssub.s32 128, 128
      %1094 = vsyncadd [#allocation4], %s1093
      %s1096 = sshll.u32 [#allocation10], 4
      %s1097 = int_to_ptr.vmem [resolvable:$true] %s1096
      %1099 = dma.vmem_to_hbm [thread:$0]  %s1097, 128, %s5, [#allocation4]
    $region41: #{tpu_custom_call.1} parent=1 // pred_fallthru
      _
    // Predicated region
    $region42: #{tpu_custom_call.1} parent=1 // pred_check
      _
    $region43: #{tpu_custom_call.1} parent=1 // pred_check_branch
      %1101 = sbr.rel (0) target = $region45
    $region44: #{tpu_custom_call.1} parent=1 // pred_region
      %1102 = dma.done [#allocation4], 128
    $region45: #{tpu_custom_call.1} parent=1 // pred_fallthru
      _
    %1103 = vsyncpa [#allocation3], 1
    %1104 = vsyncpa [#allocation6], 1
    %1105 = vsyncpa [#allocation9], 1
    %1106 = vsyncpa [#allocation4], 1

</llo_original>
